<compile_context>
chip_gen: v7x
topology: tpu7x:2x2x1
jax: 0.10.0
libtpu: 0.0.40
codegen_flags: <defaults>
</compile_context>

<pallas_src>
import functools

import jax
import jax.numpy as jnp
from jax import lax
from jax.experimental import pallas as pl
from jax.experimental.pallas import tpu as pltpu

LN_EPS = 1e-5  # nn.LayerNorm default


def toy_model_kernel(x_ref, w1_ref, w2g_ref, bias_ref, ot_ref, *, inv_hidden):
    # Batch tile -> batch-on-lanes: [TILE_B, in] -> [in, TILE_B] (XLU transpose),
    # then bf16 for native MXU input.
    xt = jnp.transpose(x_ref[...]).astype(jnp.bfloat16)               # [in, TB]
    # fc1 (bias=False): [hidden, in] @ [in, TB] -> [hidden, TB], f32 accumulate (MXU).
    h = jnp.dot(w1_ref[...], xt, preferred_element_type=jnp.float32)
    h = jnp.maximum(h, 0.0)                                           # ReLU (VPU)
    # LayerNorm over the hidden (sublane) axis, single-pass statistics.
    s1 = jnp.sum(h, axis=0, keepdims=True)                            # [1, TB]
    s2 = jnp.sum(h * h, axis=0, keepdims=True)                        # [1, TB]
    mean = s1 * inv_hidden
    var = s2 * inv_hidden - mean * mean                               # biased, like torch
    hn = (h - mean) * lax.rsqrt(var + LN_EPS)                         # rsqrt on EUP
    # fc2 (bias=False) with the LN affine folded in:
    # [out, hidden] @ [hidden, TB] + bias[:, None]  (MXU + lane-broadcast add).
    ot = jnp.dot(w2g_ref[...], hn.astype(jnp.bfloat16),
                 preferred_element_type=jnp.float32) + bias_ref[...]
    ot_ref[...] = ot.astype(ot_ref.dtype)


def _pick_tile_b(B, max_tile):
    """Lane-aligned batch tile giving >=2 grid steps (prefer an even step count)."""
    if B < 256:
        return B  # too small to split given 128-lane output blocks: one full block
    cap = max(128, min(max_tile, (B // 2 // 128) * 128))
    for t in range(cap, 0, -128):        # prefer even #steps (v7x megacore balance)
        if pl.cdiv(B, t) % 2 == 0:
            return t
    return cap                           # fall back: largest tile with >= 2 steps


def toy_model_forward(x, w1, w2, gamma, beta, *, tile_b=512):
    """x: [B, in]; w1: [hidden, in]; w2: [out, hidden]; gamma/beta: [hidden].
    Returns [B, out] float32, matching ToyModel.forward."""
    B, in_features = x.shape
    hidden = w1.shape[0]
    out_features = w2.shape[0]

    # One-time parameter prep (tiny; stays resident in VMEM across the grid):
    #   * bf16 weights (native MXU operand dtype on v5e/v6e/v7x)
    #   * LayerNorm affine folded into fc2: (hn*gamma) @ w2.T + beta @ w2.T
    w1_b = w1.astype(jnp.bfloat16)                                     # [hidden, in]
    w2g_b = (w2 * gamma[None, :]).astype(jnp.bfloat16)                 # [out, hidden]
    bias = (w2 @ beta).reshape(out_features, 1).astype(jnp.float32)    # [out, 1]

    tile = _pick_tile_b(B, tile_b)
    num_tiles = pl.cdiv(B, tile)

    kernel = functools.partial(toy_model_kernel, inv_hidden=1.0 / float(hidden))

    out_t = pl.pallas_call(
        kernel,
        out_shape=jax.ShapeDtypeStruct((out_features, B), jnp.float32),
        grid=(num_tiles,),
        in_specs=[
            # x: tiled along batch; no wrapper-side pad — a ragged last block is
            # clipped by Pallas (per-batch-column math, so it is numerically safe).
            pl.BlockSpec((tile, in_features), lambda i: (i, 0)),
            # weights / folded bias: grid-invariant, resident in VMEM.
            pl.BlockSpec((hidden, in_features), lambda i: (0, 0)),
            pl.BlockSpec((out_features, hidden), lambda i: (0, 0)),
            pl.BlockSpec((out_features, 1), lambda i: (0, 0)),
        ],
        # Lane-dense output: [out, TILE_B] blocks of the transposed result.
        out_specs=pl.BlockSpec((out_features, tile), lambda i: (0, i)),
        compiler_params=pltpu.CompilerParams(
            dimension_semantics=("parallel",),  # shard batch tiles across v7x TCs
        ),
    )(x, w1_b, w2g_b, bias)

    # Tiny [out, B] -> [B, out] transpose back to the PyTorch module's layout.
    return out_t.T


def reference_forward(x, w1, w2, gamma, beta):
    h = x @ w1.T
    h = jnp.maximum(h, 0.0)
    mean = jnp.mean(h, axis=-1, keepdims=True)
    var = jnp.mean((h - mean) ** 2, axis=-1, keepdims=True)
    hn = (h - mean) / jnp.sqrt(var + LN_EPS) * gamma + beta
    return hn @ w2.T


if __name__ == "__main__":
    # ToyModel(in_features=32, out_features=16); hidden = 10 (fixed by the module).
    in_features, hidden, out_features = 32, 10, 16

    key = jax.random.PRNGKey(0)
    kx, kw1, kw2, kg, kb = jax.random.split(key, 5)

    w1 = jax.random.uniform(
        kw1, (hidden, in_features), dtype=jnp.float32,
        minval=-1.0 / jnp.sqrt(in_features), maxval=1.0 / jnp.sqrt(in_features))
    w2 = jax.random.uniform(
        kw2, (out_features, hidden), dtype=jnp.float32,
        minval=-1.0 / jnp.sqrt(hidden), maxval=1.0 / jnp.sqrt(hidden))
    # Non-default LN affine params to exercise the gamma/beta folding path.
    gamma = 1.0 + 0.1 * jax.random.normal(kg, (hidden,), dtype=jnp.float32)
    beta = 0.1 * jax.random.normal(kb, (hidden,), dtype=jnp.float32)

    # bf16 MXU operands -> compare with tolerances, not bit-exactly.
    atol = rtol = 5e-2

    # Case 1: tiny batch (single full-extent block), the ToyModel-scale demo.
    x_small = jax.random.normal(kx, (8, in_features), dtype=jnp.float32)
    out_small = jax.block_until_ready(toy_model_forward(x_small, w1, w2, gamma, beta))
    ref_small = reference_forward(x_small, w1, w2, gamma, beta)
    assert out_small.shape == (8, out_features)
    assert out_small.dtype == jnp.float32
    assert jnp.allclose(out_small, ref_small, atol=atol, rtol=rtol)

    # Case 2: gridded path with a ragged last block (B=600 -> 3 tiles of 256).
    x_big = jax.random.normal(kx, (600, in_features), dtype=jnp.float32)
    out_big = jax.block_until_ready(toy_model_forward(x_big, w1, w2, gamma, beta))
    ref_big = reference_forward(x_big, w1, w2, gamma, beta)
    assert out_big.shape == (600, out_features)
    assert out_big.dtype == jnp.float32
    assert jnp.allclose(out_big, ref_big, atol=atol, rtol=rtol)

    print("KERNEL_OK")
</pallas_src>

<mosaic_0001>
module attributes {stable_mosaic.version = 11 : i64} {
  func.func @toy_model_kernel(%arg0: i32, %arg1: memref<8x32xf32, #tpu.memory_space<vmem>>, %arg2: memref<10x32xbf16, #tpu.memory_space<vmem>>, %arg3: memref<16x10xbf16, #tpu.memory_space<vmem>>, %arg4: memref<16x1xf32, #tpu.memory_space<vmem>>, %arg5: memref<16x8xf32, #tpu.memory_space<vmem>>) attributes {dimension_semantics = [#tpu.dimension_semantics<parallel>], iteration_bounds = array<i64: 1>, scalar_prefetch = 0 : i64, scratch_operands = 0 : i64, tpu.core_type = #tpu.core_type<tc>, window_params = [{transform_indices = @transform_0, window_bounds = array<i64: 8, 32>}, {pipeline_mode = #tpu.pipeline_mode<synchronous>, transform_indices = @transform_1, window_bounds = array<i64: 10, 32>}, {pipeline_mode = #tpu.pipeline_mode<synchronous>, transform_indices = @transform_2, window_bounds = array<i64: 16, 10>}, {pipeline_mode = #tpu.pipeline_mode<synchronous>, transform_indices = @transform_3, window_bounds = array<i64: 16, 1>}, {transform_indices = @transform_4, window_bounds = array<i64: 16, 8>}]} {
    %c0 = arith.constant 0 : index
    %c0_0 = arith.constant 0 : index
    %0 = vector.load %arg1[%c0, %c0_0] : memref<8x32xf32, #tpu.memory_space<vmem>>, vector<8x32xf32>
    %1 = tpu.transpose %0, [1, 0] : vector<8x32xf32> -> vector<32x8xf32>
    %2 = arith.truncf %1 : vector<32x8xf32> to vector<32x8xbf16>
    %c0_1 = arith.constant 0 : index
    %c0_2 = arith.constant 0 : index
    %3 = vector.load %arg2[%c0_1, %c0_2] : memref<10x32xbf16, #tpu.memory_space<vmem>>, vector<10x32xbf16>
    %cst = arith.constant dense<0.000000e+00> : vector<10x8xf32>
    %4 = tpu.matmul %3, %2, %cst {dimension_numbers = #tpu.dot_dimension_numbers<[1], [0], [0], [1], [0, 0, 1, 1], [], []>} : vector<10x32xbf16>, vector<32x8xbf16>, vector<10x8xf32> -> vector<10x8xf32>
    %cst_3 = arith.constant 0.000000e+00 : f32
    %5 = vector.broadcast %cst_3 : f32 to vector<10x8xf32>
    %6 = arith.maximumf %4, %5 : vector<10x8xf32>
    %cst_4 = arith.constant dense<0.000000e+00> : vector<8xf32>
    %7 = vector.multi_reduction <add>, %6, %cst_4 [0] : vector<10x8xf32> to vector<8xf32>
    %8 = vector.shape_cast %7 : vector<8xf32> to vector<1x8xf32>
    %9 = arith.mulf %6, %6 : vector<10x8xf32>
    %cst_5 = arith.constant dense<0.000000e+00> : vector<8xf32>
    %10 = vector.multi_reduction <add>, %9, %cst_5 [0] : vector<10x8xf32> to vector<8xf32>
    %11 = vector.shape_cast %10 : vector<8xf32> to vector<1x8xf32>
    %cst_6 = arith.constant 1.000000e-01 : f32
    %12 = vector.broadcast %cst_6 : f32 to vector<1x8xf32>
    %13 = arith.mulf %8, %12 : vector<1x8xf32>
    %cst_7 = arith.constant 1.000000e-01 : f32
    %14 = vector.broadcast %cst_7 : f32 to vector<1x8xf32>
    %15 = arith.mulf %11, %14 : vector<1x8xf32>
    %16 = arith.mulf %13, %13 : vector<1x8xf32>
    %17 = arith.subf %15, %16 : vector<1x8xf32>
    %18 = vector.broadcast %13 : vector<1x8xf32> to vector<10x8xf32>
    %19 = arith.subf %6, %18 : vector<10x8xf32>
    %cst_8 = arith.constant 9.99999974E-6 : f32
    %20 = vector.broadcast %cst_8 : f32 to vector<1x8xf32>
    %21 = arith.addf %17, %20 : vector<1x8xf32>
    %22 = math.rsqrt %21 : vector<1x8xf32>
    %23 = vector.broadcast %22 : vector<1x8xf32> to vector<10x8xf32>
    %24 = arith.mulf %19, %23 : vector<10x8xf32>
    %c0_9 = arith.constant 0 : index
    %c0_10 = arith.constant 0 : index
    %25 = vector.load %arg3[%c0_9, %c0_10] : memref<16x10xbf16, #tpu.memory_space<vmem>>, vector<16x10xbf16>
    %26 = arith.truncf %24 : vector<10x8xf32> to vector<10x8xbf16>
    %cst_11 = arith.constant dense<0.000000e+00> : vector<16x8xf32>
    %27 = tpu.matmul %25, %26, %cst_11 {dimension_numbers = #tpu.dot_dimension_numbers<[1], [0], [0], [1], [0, 0, 1, 1], [], []>} : vector<16x10xbf16>, vector<10x8xbf16>, vector<16x8xf32> -> vector<16x8xf32>
    %c0_12 = arith.constant 0 : index
    %c0_13 = arith.constant 0 : index
    %28 = vector.load %arg4[%c0_12, %c0_13] : memref<16x1xf32, #tpu.memory_space<vmem>>, vector<16x1xf32>
    %29 = vector.broadcast %28 : vector<16x1xf32> to vector<16x8xf32>
    %30 = arith.addf %27, %29 : vector<16x8xf32>
    %c0_14 = arith.constant 0 : index
    %c0_15 = arith.constant 0 : index
    %31 = vector.load %arg5[%c0_14, %c0_15] : memref<16x8xf32, #tpu.memory_space<vmem>>, vector<16x8xf32>
    tpu.vector_store %arg5[%c0_14, %c0_15], %30 {strides = array<i32>} : memref<16x8xf32, #tpu.memory_space<vmem>>, vector<16x8xf32>,
    return
  }
  func.func @transform_0(%arg0: i32) -> (i32, i32) {
    %c0_i32 = arith.constant 0 : i32
    %c0_i32_0 = arith.constant 0 : i32
    return %arg0, %c0_i32 : i32, i32
  }
  func.func @transform_1(%arg0: i32) -> (i32, i32) {
    %c0_i32 = arith.constant 0 : i32
    %c0_i32_0 = arith.constant 0 : i32
    %c0_i32_1 = arith.constant 0 : i32
    return %c0_i32, %c0_i32_0 : i32, i32
  }
  func.func @transform_2(%arg0: i32) -> (i32, i32) {
    %c0_i32 = arith.constant 0 : i32
    %c0_i32_0 = arith.constant 0 : i32
    %c0_i32_1 = arith.constant 0 : i32
    return %c0_i32, %c0_i32_0 : i32, i32
  }
  func.func @transform_3(%arg0: i32) -> (i32, i32) {
    %c0_i32 = arith.constant 0 : i32
    %c0_i32_0 = arith.constant 0 : i32
    %c0_i32_1 = arith.constant 0 : i32
    return %c0_i32, %c0_i32_0 : i32, i32
  }
  func.func @transform_4(%arg0: i32) -> (i32, i32) {
    %c0_i32 = arith.constant 0 : i32
    %c0_i32_0 = arith.constant 0 : i32
    return %c0_i32, %arg0 : i32, i32
  }
}

</mosaic_0001>

<llo_original>
// kernel: tpu_custom_call.1
$region0: #{tpu_custom_call.1}
  #allocation0 [shape = 'u32[]', space=smem, size = 0x4, offset = 0x4, fixed_abs, tag = 'smem constant byte address 0x4 - core index']
  #allocation1 [shape = 'u32[144,128]{1,0:T(1,128)}', space=vmem, size = 0x12000, scoped, tag = 'internal scratch']
  %s0 = inlined_call_operand.vmem [shape: f32[8,32], index: 0, kind: input, shape index: {}]
  %s1 = inlined_call_operand.vmem [shape: bf16[10,32], index: 1, kind: input, shape index: {}]
  %s2 = inlined_call_operand.vmem [shape: bf16[16,10], index: 2, kind: input, shape index: {}]
  %s3 = inlined_call_operand.vmem [shape: f32[16,1], index: 3, kind: input, shape index: {}]
  %s4 = inlined_call_operand.vmem [shape: f32[16,8], index: 4, kind: output, shape index: {}]
  %s5 = sld [smem:[#allocation0]]
  $region26: #{tpu_custom_call.1} parent=0
    _
  %s7 = ssub.s32 1, %s5
  %s8 = scalar_select 0, %s7, %s5
  // Predicated region
  $region2: #{tpu_custom_call.1} parent=0 // pred_check
    _
  $region3: #{tpu_custom_call.1} parent=0 // pred_check_branch
    %10 = sbr.rel (0) target = $region5
  $region4: #{tpu_custom_call.1} parent=0 // pred_region
    _
  $region5: #{tpu_custom_call.1} parent=0 // pred_fallthru
    _
  // Predicated region
  $region6: #{tpu_custom_call.1} parent=0 // pred_check
    _
  $region7: #{tpu_custom_call.1} parent=0 // pred_check_branch
    %12 = sbr.rel (0) target = $region9
  $region8: #{tpu_custom_call.1} parent=0 // pred_region
    _
  $region9: #{tpu_custom_call.1} parent=0 // pred_fallthru
    _
  // Predicated region
  $region10: #{tpu_custom_call.1} parent=0 // pred_check
    _
  $region11: #{tpu_custom_call.1} parent=0 // pred_check_branch
    %14 = sbr.rel (0) target = $region13
  $region12: #{tpu_custom_call.1} parent=0 // pred_region
    _
  $region13: #{tpu_custom_call.1} parent=0 // pred_fallthru
    _
  // Predicated region
  $region14: #{tpu_custom_call.1} parent=0 // pred_check
    _
  $region15: #{tpu_custom_call.1} parent=0 // pred_check_branch
    %16 = sbr.rel (0) target = $region17
  $region16: #{tpu_custom_call.1} parent=0 // pred_region
    _
  $region17: #{tpu_custom_call.1} parent=0 // pred_fallthru
    _
  %v18 = vld [vmem:[%s0] sm:$0xff]
  %19 = vxpose.xlu0.b32.start [1/16] %v18, 128
  %20 = vxpose.xlu0.b32.cont [2/16] 0.0, 128
  %21 = vxpose.xlu0.b32.cont [3/16] 0.0, 128
  %22 = vxpose.xlu0.b32.cont [4/16] 0.0, 128
  %23 = vxpose.xlu0.b32.cont [5/16] 0.0, 128
  %24 = vxpose.xlu0.b32.cont [6/16] 0.0, 128
  %25 = vxpose.xlu0.b32.cont [7/16] 0.0, 128
  %26 = vxpose.xlu0.b32.cont [8/16] 0.0, 128
  %27 = vxpose.xlu0.b32.cont [9/16] 0.0, 128
  %28 = vxpose.xlu0.b32.cont [10/16] 0.0, 128
  %29 = vxpose.xlu0.b32.cont [11/16] 0.0, 128
  %30 = vxpose.xlu0.b32.cont [12/16] 0.0, 128
  %31 = vxpose.xlu0.b32.cont [13/16] 0.0, 128
  %32 = vxpose.xlu0.b32.cont [14/16] 0.0, 128
  %33 = vxpose.xlu0.b32.cont [15/16] 0.0, 128
  %34 = vxpose.xlu0.b32.end [16/16] 0.0, 128
  %v35 = vpop.trf.xlu0
  %v36 = vpop.trf.xlu0
  %v37 = vpop.trf.xlu0
  %v38 = vpop.trf.xlu0
  %v39 = vpop.trf.xlu0
  %v40 = vpop.trf.xlu0
  %v41 = vpop.trf.xlu0
  %v42 = vpop.trf.xlu0
  %v43 = vpop.trf.xlu0
  %v44 = vpop.trf.xlu0
  %v45 = vpop.trf.xlu0
  %v46 = vpop.trf.xlu0
  %v47 = vpop.trf.xlu0
  %v48 = vpop.trf.xlu0
  %v49 = vpop.trf.xlu0
  %v50 = vpop.trf.xlu0
  %v51 = vpack.c.bf16 %v36, %v35
  %v52 = vpack.c.bf16 %v38, %v37
  %v53 = vld [vmem:[%s1] sm:$0xf]
  %v54 = vld [vmem:[%s1 + $0x4] sm:$0x1]
  %v57 = vunpack.c.l.b16 %v53
  %v58 = vunpack.c.l.b16 %v54
  %v59 = vpack.c.b16 %v58, %v57
  %vm60 = vcmask 261120
  %v62 = vsel %vm60, %v59, 0
  %64 = vmatprep.subr.bf16.mxu0 0
  %65 = vmatpush1.bf16.msra.mxu0 %v51
  %66 = vmatprep.subr.bf16.mxu0 0
  %67 = vmatpush1.bf16.msra.mxu0 %v52
  %68 = vmatprep.subr.bf16.mxu0 0
  %69 = vmatpush1.bf16.msra.mxu0 0
  %70 = vmatprep.subr.bf16.mxu0 0
  %71 = vmatpush1.bf16.msra.mxu0 0
  %72 = vmatprep.subr.bf16.mxu0 0
  %73 = vmatpush1.bf16.msra.mxu0 0
  %74 = vmatprep.subr.bf16.mxu0 0
  %75 = vmatpush1.bf16.msra.mxu0 0
  %76 = vmatprep.subr.bf16.mxu0 0
  %77 = vmatpush1.bf16.msra.mxu0 0
  %78 = vmatprep.subr.bf16.mxu0 0
  %79 = vmatpush1.bf16.msra.mxu0 0
  %80 = vmatprep.subr.bf16.mxu0 0
  %81 = vmatpush1.bf16.msra.mxu0 0
  %82 = vmatprep.subr.bf16.mxu0 0
  %83 = vmatpush1.bf16.msra.mxu0 0
  %84 = vmatprep.subr.bf16.mxu0 0
  %85 = vmatpush1.bf16.msra.mxu0 0
  %86 = vmatprep.subr.bf16.mxu0 0
  %87 = vmatpush1.bf16.msra.mxu0 0
  %88 = vmatprep.subr.bf16.mxu0 0
  %89 = vmatpush1.bf16.msra.mxu0 0
  %90 = vmatprep.subr.bf16.mxu0 0
  %91 = vmatpush1.bf16.msra.mxu0 0
  %92 = vmatprep.subr.bf16.mxu0 0
  %93 = vmatpush1.bf16.msra.mxu0 0
  %94 = vmatprep.subr.bf16.mxu0 0
  %95 = vmatpush1.bf16.msra.mxu0 0
  %96 = vmatprep.mubr.bf16.mxu0 0
  %97 = vmatmul.mubr.bf16.gmra.mrb[0].mxu0 %v62
  %v98 = vpop.f32.mrb[0].mxu0
  %v99 = vadd.f32 0.0, %v98
  %v100 = vpop.f32.mrb[0].mxu0
  %v101 = vpop.f32.mrb[0].mxu0
  %v102 = vadd.f32 0.0, %v101
  %v103 = vpop.f32.mrb[0].mxu0
  %104 = vdwg.mxu0
  %v105 = vmax.f32 %v99, 0.0
  %v106 = vmax.f32 %v102, 0.0
  %vm107 = vcmask 64512
  %v108 = vsel %vm107, %v105, 0.0
  %vm109 = vcmask 58368
  %v110 = vsel %vm109, %v106, 0.0
  %v111 = vadd.f32 %v108, %v110
  %v112 = vrot.slane %v111, 4
  %v113 = vadd.f32 %v111, %v112
  %v114 = vrot.slane %v113, 2
  %v115 = vadd.f32 %v113, %v114
  %v116 = vrot.slane %v115, 1
  %v117 = vadd.f32 %v115, %v116
  %v118 = vmul.f32 %v105, %v105
  %v119 = vmul.f32 %v106, %v106
  %v120 = vsel %vm107, %v118, 0.0
  %v121 = vsel %vm109, %v119, 0.0
  %v122 = vadd.f32 %v120, %v121
  %v123 = vrot.slane %v122, 4
  %v124 = vadd.f32 %v122, %v123
  %v125 = vrot.slane %v124, 2
  %v126 = vadd.f32 %v124, %v125
  %v127 = vrot.slane %v126, 1
  %v128 = vadd.f32 %v126, %v127
  %v129 = vmul.f32 %v117, 0.1
  %v130 = vmul.f32 %v128, 0.1
  %v131 = vmul.f32 %v129, %v129
  %v132 = vsub.f32 %v130, %v131
  %v133 = vsub.f32 %v105, %v129
  %v134 = vsub.f32 %v106, %v129
  %v135 = vadd.f32 %v132, 1e-05
  %v136 = vrsqrt.pop %v135
  %v137 = vmul.f32 %v133, %v136
  %v138 = vmul.f32 %v134, %v136
  %v139 = vld [vmem:[%s2] sm:$0xf]
  %v140 = vld [vmem:[%s2 + $0x4] sm:$0xf]
  %v141 = vpack.c.bf16 %v138, %v137
  %v142 = vld [vmem:[%s3] sm:$0xff]
  %v143 = vld [vmem:[%s3 + $0x8] sm:$0xff]
  %145 = vset.pattern.permute.xlu0 0
  %146 = vperm.xlu0 %145, %v142
  %v147 = vpop.permute.xlu0 %146
  %150 = vset.pattern.permute.xlu0 0
  %151 = vperm.xlu0 %150, %v143
  %v152 = vpop.permute.xlu0 %151
  %v156 = vunpack.c.l.b16 %v139
  %v157 = vunpack.c.l.b16 %v140
  %v158 = vpack.c.b16 %v157, %v156
  %vm159 = vcmask 80896
  %v161 = vsel %vm159, %v158, 0
  %vm163 = vcmask 1044480
  %v165 = vsel %vm163, %v141, 0
  %167 = vmatprep.subr.bf16.mxu0 0
  %168 = vmatpush1.bf16.msra.mxu0 %v165
  %169 = vmatprep.subr.bf16.mxu0 0
  %170 = vmatpush1.bf16.msra.mxu0 0
  %171 = vmatprep.subr.bf16.mxu0 0
  %172 = vmatpush1.bf16.msra.mxu0 0
  %173 = vmatprep.subr.bf16.mxu0 0
  %174 = vmatpush1.bf16.msra.mxu0 0
  %175 = vmatprep.subr.bf16.mxu0 0
  %176 = vmatpush1.bf16.msra.mxu0 0
  %177 = vmatprep.subr.bf16.mxu0 0
  %178 = vmatpush1.bf16.msra.mxu0 0
  %179 = vmatprep.subr.bf16.mxu0 0
  %180 = vmatpush1.bf16.msra.mxu0 0
  %181 = vmatprep.subr.bf16.mxu0 0
  %182 = vmatpush1.bf16.msra.mxu0 0
  %183 = vmatprep.subr.bf16.mxu0 0
  %184 = vmatpush1.bf16.msra.mxu0 0
  %185 = vmatprep.subr.bf16.mxu0 0
  %186 = vmatpush1.bf16.msra.mxu0 0
  %187 = vmatprep.subr.bf16.mxu0 0
  %188 = vmatpush1.bf16.msra.mxu0 0
  %189 = vmatprep.subr.bf16.mxu0 0
  %190 = vmatpush1.bf16.msra.mxu0 0
  %191 = vmatprep.subr.bf16.mxu0 0
  %192 = vmatpush1.bf16.msra.mxu0 0
  %193 = vmatprep.subr.bf16.mxu0 0
  %194 = vmatpush1.bf16.msra.mxu0 0
  %195 = vmatprep.subr.bf16.mxu0 0
  %196 = vmatpush1.bf16.msra.mxu0 0
  %197 = vmatprep.subr.bf16.mxu0 0
  %198 = vmatpush1.bf16.msra.mxu0 0
  %199 = vmatprep.mubr.bf16.mxu0 0
  %200 = vmatmul.mubr.bf16.gmra.mrb[0].mxu0 %v161
  %v201 = vpop.f32.mrb[0].mxu0
  %v202 = vadd.f32 %v147, %v201
  %v203 = vpop.f32.mrb[0].mxu0
  %v204 = vpop.f32.mrb[0].mxu0
  %v205 = vadd.f32 %v152, %v204
  %v206 = vpop.f32.mrb[0].mxu0
  %207 = vdwg.mxu0
  %208 = vst.msk [vmem:[%s4] sm:$0xff] %vm107, %v202
  %209 = vst.msk [vmem:[%s4 + $0x8] sm:$0xff] %vm107, %v205
  // Predicated region
  $region18: #{tpu_custom_call.1} parent=0 // pred_check
    _
  $region19: #{tpu_custom_call.1} parent=0 // pred_check_branch
    %211 = sbr.rel (0) target = $region21
  $region20: #{tpu_custom_call.1} parent=0 // pred_region
    _
  $region21: #{tpu_custom_call.1} parent=0 // pred_fallthru
    _
  // Predicated region
  $region22: #{tpu_custom_call.1} parent=0 // pred_check
    _
  $region23: #{tpu_custom_call.1} parent=0 // pred_check_branch
    %213 = sbr.rel (0) target = $region25
  $region24: #{tpu_custom_call.1} parent=0 // pred_region
    _
  $region25: #{tpu_custom_call.1} parent=0 // pred_fallthru
    _

</llo_original>
